<compile_context>
chip_gen: v6e
topology: v6e:2x2x1
jax: 0.10.0
libtpu: 0.0.40
codegen_flags: <defaults>
</compile_context>

<pallas_src>
import numpy as np
import jax
import jax.numpy as jnp
from jax.experimental import pallas as pl
from jax.experimental.pallas import tpu as pltpu

SIGNAL_DIM = 32

# murmur3 fmix32 constants, expressed as signed int32 (wrap-around semantics).
_M1 = np.int32(-2048144789)   # 0x85EBCA6B
_M2 = np.int32(-1028477387)   # 0xC2B2AE35
_K1 = np.int32(-1640531527)   # 0x9E3779B9  (golden-ratio key for stream 1)
_K2 = np.int32(0x7F4A7C15)    # key for stream 2


def _srl(h, k):
    """Logical right shift by k on int32 (arith shift + mask clears sign extension)."""
    return (h >> k) & ((1 << (32 - k)) - 1)


def _fmix32(h):
    """murmur3 finalizer: full-avalanche 32-bit mixer (int32, wrap-around)."""
    h = h ^ _srl(h, 16)
    h = h * _M1
    h = h ^ _srl(h, 13)
    h = h * _M2
    h = h ^ _srl(h, 16)
    return h


def _uniform01(h):
    """Top 24 hash bits -> float32 uniform in [0, 1)."""
    bits24 = (h >> 8) & 0xFFFFFF
    return bits24.astype(jnp.float32) * np.float32(1.0 / (1 << 24))


def _noise_kernel(seed_ref, out_ref):
    """Writes a lane-dense packed Gaussian noise tile of shape (g_tile, 8*s_gen)."""
    g_tile, packed_w = out_ref.shape
    pair_w = packed_w // 2            # Box-Muller pairs: lanes [0,pair_w) cos, rest sin

    # Per-stream scalar keys derived from the seed (scalar-core work only).
    seed = seed_ref[0]
    k1 = _fmix32(seed ^ _K1)
    k2 = _fmix32(seed ^ _K2)

    # Unique counter per pair = global flat index over the packed pair grid.
    # program_id folds the tile offset in, so noise is independent of the tiling.
    g0 = pl.program_id(0) * g_tile
    row = jax.lax.broadcasted_iota(jnp.int32, (g_tile, pair_w), 0) + g0
    col = jax.lax.broadcasted_iota(jnp.int32, (g_tile, pair_w), 1)
    ctr = row * pair_w + col          # NOTE: wraps int32 if N*signal_dim/2 > 2^31

    u1 = _uniform01(_fmix32(ctr ^ k1))   # [0, 1)
    u2 = _uniform01(_fmix32(ctr ^ k2))   # [0, 1)

    # Box-Muller, using BOTH branches (halves the EUP work per random element).
    r = jnp.sqrt(-2.0 * jnp.log(1.0 - u1))      # 1 - u1 in (0, 1] -> finite log
    theta = np.float32(2.0 * np.pi) * u2
    # Two full-width, lane-aligned stores (pair_w is a multiple of 128 for s_gen=32).
    out_ref[:, :pair_w] = (r * jnp.cos(theta)).astype(out_ref.dtype)
    out_ref[:, pair_w:] = (r * jnp.sin(theta)).astype(out_ref.dtype)


def _round_up(n, m):
    return ((n + m - 1) // m) * m


def _choose_group_tile(n_groups, max_groups):
    """Tile size in 8-row groups."""
    # Small problems: single full-extent tile (block dim == array dim is always legal).
    if n_groups <= 16:
        return n_groups
    # Otherwise: multiple of 8 (sublane tiling), <= max_groups (keeps double-buffered
    # blocks + f32 temps around ~2 MiB at 256), and <= n_groups//2 so the 1-D grid has
    # >= 2 steps (lets v7x's two TensorCores split the "parallel" axis).
    g = min(max_groups, (n_groups // 2 // 8) * 8)
    return max(8, g)


def _gaussian_noise(n_rows, signal_dim, seed, dtype, max_groups_tile=256):
    """(n_rows, signal_dim) standard-normal noise, pure function of (seed,row,col)."""
    s_gen = signal_dim + (signal_dim & 1)     # Box-Muller needs an even column count
    packed_w = 8 * s_gen                      # lane-dense packed width (256 for S=32)
    n_groups = pl.cdiv(n_rows, 8)
    g = _choose_group_tile(n_groups, max_groups_tile)
    n_groups_pad = _round_up(n_groups, g)

    seed_arr = jnp.asarray([seed], dtype=jnp.int32)

    packed = pl.pallas_call(
        _noise_kernel,
        out_shape=jax.ShapeDtypeStruct((n_groups_pad, packed_w), dtype),
        grid=(n_groups_pad // g,),
        in_specs=[pl.BlockSpec(memory_space=pltpu.MemorySpace.SMEM)],   # scalar seed
        out_specs=pl.BlockSpec((g, packed_w), lambda i: (i, 0)),        # lane-dense tile
        compiler_params=pltpu.CompilerParams(
            dimension_semantics=("parallel",),    # row-groups independent -> megacore
        ),
    )(seed_arr)

    # Row-major "un-packing": (groups, 8*s_gen) -> (rows, s_gen); pure layout view.
    noise = packed.reshape(n_groups_pad * 8, s_gen)
    return noise[:n_rows, :signal_dim]


def random_signal(x, signal_dim, seed=0, max_groups_tile=256):
    """Pallas equivalent of RandomSignal(signal_dim).forward(x) for 2-D x.

    Noise is a deterministic function of (seed, row, col); vary `seed` across calls to
    emulate torch/np's stateful randn.  The concat with x happens in the wrapper so the
    kernel's stores stay lane-dense (review item 2).
    """
    noise = _gaussian_noise(x.shape[0], signal_dim, seed, x.dtype, max_groups_tile)
    return jnp.concatenate([x, noise], axis=1)


if __name__ == "__main__":
    key = jax.random.PRNGKey(0)

    # --- small demo shape consistent with the module: N nodes x F features ---
    N, F = 8, 16
    x = jax.random.normal(key, (N, F), dtype=jnp.float32)

    out = jax.block_until_ready(random_signal(x, SIGNAL_DIM, seed=42))

    # shape / dtype match torch.cat([x, randn(N, signal_dim)], dim=1)
    assert out.shape == (N, F + SIGNAL_DIM), out.shape
    assert out.dtype == x.dtype

    # left half must be exactly x
    assert bool(jnp.all(out[:, :F] == x))

    # right half: finite, roughly standard-normal samples (loose sanity bounds)
    tail = out[:, F:]
    assert bool(jnp.all(jnp.isfinite(tail)))
    assert float(jnp.abs(jnp.mean(tail))) < 0.5
    assert 0.3 < float(jnp.std(tail)) < 1.7

    # --- tiling-invariance check: 2-step vs 4-step grid give identical results ---
    N2 = 256
    x2 = jax.random.normal(jax.random.PRNGKey(1), (N2, F), dtype=jnp.float32)
    out_a = jax.block_until_ready(random_signal(x2, SIGNAL_DIM, seed=7))
    out_b = jax.block_until_ready(random_signal(x2, SIGNAL_DIM, seed=7, max_groups_tile=8))
    assert out_a.shape == out_b.shape == (N2, F + SIGNAL_DIM)
    assert bool(jnp.all(out_a[:, :F] == x2))
    assert bool(jnp.all(out_a == out_b))   # noise is a pure fn of (seed,row,col)

    print("KERNEL_OK")
</pallas_src>

<mosaic_0001>
module attributes {stable_mosaic.version = 11 : i64} {
  func.func @_noise_kernel(%arg0: i32, %arg1: memref<1xi32, #tpu.memory_space<smem>>, %arg2: memref<1x256xf32, #tpu.memory_space<vmem>>) attributes {dimension_semantics = [#tpu.dimension_semantics<parallel>], iteration_bounds = array<i64: 1>, scalar_prefetch = 0 : i64, scratch_operands = 0 : i64, tpu.core_type = #tpu.core_type<tc>, window_params = [{transform_indices = @transform_0, window_bounds = array<i64: 1>}, {transform_indices = @transform_1, window_bounds = array<i64: 1, 256>}]} {
    %c0 = arith.constant 0 : index
    %0 = memref.load %arg1[%c0] : memref<1xi32, #tpu.memory_space<smem>>
    %c-1640531527_i32 = arith.constant -1640531527 : i32
    %1 = arith.xori %0, %c-1640531527_i32 : i32
    %c16_i32 = arith.constant 16 : i32
    %2 = arith.shrsi %1, %c16_i32 : i32
    %c65535_i32 = arith.constant 65535 : i32
    %3 = arith.andi %2, %c65535_i32 : i32
    %4 = arith.xori %1, %3 : i32
    %c-2048144789_i32 = arith.constant -2048144789 : i32
    %5 = arith.muli %4, %c-2048144789_i32 : i32
    %c13_i32 = arith.constant 13 : i32
    %6 = arith.shrsi %5, %c13_i32 : i32
    %c524287_i32 = arith.constant 524287 : i32
    %7 = arith.andi %6, %c524287_i32 : i32
    %8 = arith.xori %5, %7 : i32
    %c-1028477387_i32 = arith.constant -1028477387 : i32
    %9 = arith.muli %8, %c-1028477387_i32 : i32
    %c16_i32_0 = arith.constant 16 : i32
    %10 = arith.shrsi %9, %c16_i32_0 : i32
    %c65535_i32_1 = arith.constant 65535 : i32
    %11 = arith.andi %10, %c65535_i32_1 : i32
    %12 = arith.xori %9, %11 : i32
    %c2135587861_i32 = arith.constant 2135587861 : i32
    %13 = arith.xori %0, %c2135587861_i32 : i32
    %c16_i32_2 = arith.constant 16 : i32
    %14 = arith.shrsi %13, %c16_i32_2 : i32
    %c65535_i32_3 = arith.constant 65535 : i32
    %15 = arith.andi %14, %c65535_i32_3 : i32
    %16 = arith.xori %13, %15 : i32
    %c-2048144789_i32_4 = arith.constant -2048144789 : i32
    %17 = arith.muli %16, %c-2048144789_i32_4 : i32
    %c13_i32_5 = arith.constant 13 : i32
    %18 = arith.shrsi %17, %c13_i32_5 : i32
    %c524287_i32_6 = arith.constant 524287 : i32
    %19 = arith.andi %18, %c524287_i32_6 : i32
    %20 = arith.xori %17, %19 : i32
    %c-1028477387_i32_7 = arith.constant -1028477387 : i32
    %21 = arith.muli %20, %c-1028477387_i32_7 : i32
    %c16_i32_8 = arith.constant 16 : i32
    %22 = arith.shrsi %21, %c16_i32_8 : i32
    %c65535_i32_9 = arith.constant 65535 : i32
    %23 = arith.andi %22, %c65535_i32_9 : i32
    %24 = arith.xori %21, %23 : i32
    %c1_i32 = arith.constant 1 : i32
    %25 = arith.muli %arg0, %c1_i32 : i32
    %26 = tpu.iota {dimensions = array<i32: 0>} : vector<1x128xi32>
    %27 = vector.broadcast %25 : i32 to vector<1x128xi32>
    %28 = arith.addi %26, %27 : vector<1x128xi32>
    %29 = tpu.iota {dimensions = array<i32: 1>} : vector<1x128xi32>
    %c128_i32 = arith.constant 128 : i32
    %30 = vector.broadcast %c128_i32 : i32 to vector<1x128xi32>
    %31 = arith.muli %28, %30 : vector<1x128xi32>
    %32 = arith.addi %31, %29 : vector<1x128xi32>
    %33 = vector.broadcast %12 : i32 to vector<1x128xi32>
    %34 = arith.xori %32, %33 : vector<1x128xi32>
    %c16_i32_10 = arith.constant 16 : i32
    %35 = vector.broadcast %c16_i32_10 : i32 to vector<1x128xi32>
    %36 = arith.shrsi %34, %35 : vector<1x128xi32>
    %c65535_i32_11 = arith.constant 65535 : i32
    %37 = vector.broadcast %c65535_i32_11 : i32 to vector<1x128xi32>
    %38 = arith.andi %36, %37 : vector<1x128xi32>
    %39 = arith.xori %34, %38 : vector<1x128xi32>
    %c-2048144789_i32_12 = arith.constant -2048144789 : i32
    %40 = vector.broadcast %c-2048144789_i32_12 : i32 to vector<1x128xi32>
    %41 = arith.muli %39, %40 : vector<1x128xi32>
    %c13_i32_13 = arith.constant 13 : i32
    %42 = vector.broadcast %c13_i32_13 : i32 to vector<1x128xi32>
    %43 = arith.shrsi %41, %42 : vector<1x128xi32>
    %c524287_i32_14 = arith.constant 524287 : i32
    %44 = vector.broadcast %c524287_i32_14 : i32 to vector<1x128xi32>
    %45 = arith.andi %43, %44 : vector<1x128xi32>
    %46 = arith.xori %41, %45 : vector<1x128xi32>
    %c-1028477387_i32_15 = arith.constant -1028477387 : i32
    %47 = vector.broadcast %c-1028477387_i32_15 : i32 to vector<1x128xi32>
    %48 = arith.muli %46, %47 : vector<1x128xi32>
    %c16_i32_16 = arith.constant 16 : i32
    %49 = vector.broadcast %c16_i32_16 : i32 to vector<1x128xi32>
    %50 = arith.shrsi %48, %49 : vector<1x128xi32>
    %c65535_i32_17 = arith.constant 65535 : i32
    %51 = vector.broadcast %c65535_i32_17 : i32 to vector<1x128xi32>
    %52 = arith.andi %50, %51 : vector<1x128xi32>
    %53 = arith.xori %48, %52 : vector<1x128xi32>
    %c8_i32 = arith.constant 8 : i32
    %54 = vector.broadcast %c8_i32 : i32 to vector<1x128xi32>
    %55 = arith.shrsi %53, %54 : vector<1x128xi32>
    %c16777215_i32 = arith.constant 16777215 : i32
    %56 = vector.broadcast %c16777215_i32 : i32 to vector<1x128xi32>
    %57 = arith.andi %55, %56 : vector<1x128xi32>
    %58 = arith.sitofp %57 : vector<1x128xi32> to vector<1x128xf32>
    %cst = arith.constant 5.96046448E-8 : f32
    %59 = vector.broadcast %cst : f32 to vector<1x128xf32>
    %60 = arith.mulf %58, %59 : vector<1x128xf32>
    %61 = vector.broadcast %24 : i32 to vector<1x128xi32>
    %62 = arith.xori %32, %61 : vector<1x128xi32>
    %c16_i32_18 = arith.constant 16 : i32
    %63 = vector.broadcast %c16_i32_18 : i32 to vector<1x128xi32>
    %64 = arith.shrsi %62, %63 : vector<1x128xi32>
    %c65535_i32_19 = arith.constant 65535 : i32
    %65 = vector.broadcast %c65535_i32_19 : i32 to vector<1x128xi32>
    %66 = arith.andi %64, %65 : vector<1x128xi32>
    %67 = arith.xori %62, %66 : vector<1x128xi32>
    %c-2048144789_i32_20 = arith.constant -2048144789 : i32
    %68 = vector.broadcast %c-2048144789_i32_20 : i32 to vector<1x128xi32>
    %69 = arith.muli %67, %68 : vector<1x128xi32>
    %c13_i32_21 = arith.constant 13 : i32
    %70 = vector.broadcast %c13_i32_21 : i32 to vector<1x128xi32>
    %71 = arith.shrsi %69, %70 : vector<1x128xi32>
    %c524287_i32_22 = arith.constant 524287 : i32
    %72 = vector.broadcast %c524287_i32_22 : i32 to vector<1x128xi32>
    %73 = arith.andi %71, %72 : vector<1x128xi32>
    %74 = arith.xori %69, %73 : vector<1x128xi32>
    %c-1028477387_i32_23 = arith.constant -1028477387 : i32
    %75 = vector.broadcast %c-1028477387_i32_23 : i32 to vector<1x128xi32>
    %76 = arith.muli %74, %75 : vector<1x128xi32>
    %c16_i32_24 = arith.constant 16 : i32
    %77 = vector.broadcast %c16_i32_24 : i32 to vector<1x128xi32>
    %78 = arith.shrsi %76, %77 : vector<1x128xi32>
    %c65535_i32_25 = arith.constant 65535 : i32
    %79 = vector.broadcast %c65535_i32_25 : i32 to vector<1x128xi32>
    %80 = arith.andi %78, %79 : vector<1x128xi32>
    %81 = arith.xori %76, %80 : vector<1x128xi32>
    %c8_i32_26 = arith.constant 8 : i32
    %82 = vector.broadcast %c8_i32_26 : i32 to vector<1x128xi32>
    %83 = arith.shrsi %81, %82 : vector<1x128xi32>
    %c16777215_i32_27 = arith.constant 16777215 : i32
    %84 = vector.broadcast %c16777215_i32_27 : i32 to vector<1x128xi32>
    %85 = arith.andi %83, %84 : vector<1x128xi32>
    %86 = arith.sitofp %85 : vector<1x128xi32> to vector<1x128xf32>
    %cst_28 = arith.constant 5.96046448E-8 : f32
    %87 = vector.broadcast %cst_28 : f32 to vector<1x128xf32>
    %88 = arith.mulf %86, %87 : vector<1x128xf32>
    %cst_29 = arith.constant 1.000000e+00 : f32
    %89 = vector.broadcast %cst_29 : f32 to vector<1x128xf32>
    %90 = arith.subf %89, %60 : vector<1x128xf32>
    %91 = math.log %90 : vector<1x128xf32>
    %cst_30 = arith.constant -2.000000e+00 : f32
    %92 = vector.broadcast %cst_30 : f32 to vector<1x128xf32>
    %93 = arith.mulf %92, %91 : vector<1x128xf32>
    %94 = math.sqrt %93 : vector<1x128xf32>
    %cst_31 = arith.constant 6.28318548 : f32
    %95 = vector.broadcast %cst_31 : f32 to vector<1x128xf32>
    %96 = arith.mulf %95, %88 : vector<1x128xf32>
    %97 = math.cos %96 : vector<1x128xf32>
    %98 = arith.mulf %94, %97 : vector<1x128xf32>
    %c0_32 = arith.constant 0 : index
    %c0_33 = arith.constant 0 : index
    %99 = vector.load %arg2[%c0_32, %c0_33] : memref<1x256xf32, #tpu.memory_space<vmem>>, vector<1x128xf32>
    tpu.vector_store %arg2[%c0_32, %c0_33], %98 {strides = array<i32>} : memref<1x256xf32, #tpu.memory_space<vmem>>, vector<1x128xf32>,
    %100 = math.sin %96 : vector<1x128xf32>
    %101 = arith.mulf %94, %100 : vector<1x128xf32>
    %c0_34 = arith.constant 0 : index
    %c128 = arith.constant 128 : index
    %102 = vector.load %arg2[%c0_34, %c128] : memref<1x256xf32, #tpu.memory_space<vmem>>, vector<1x128xf32>
    tpu.vector_store %arg2[%c0_34, %c128], %101 {strides = array<i32>} : memref<1x256xf32, #tpu.memory_space<vmem>>, vector<1x128xf32>,
    return
  }
  func.func @transform_0(%arg0: i32) -> i32 {
    %c0_i32 = arith.constant 0 : i32
    %c0_i32_0 = arith.constant 0 : i32
    return %c0_i32 : i32
  }
  func.func @transform_1(%arg0: i32) -> (i32, i32) {
    %c0_i32 = arith.constant 0 : i32
    %c0_i32_0 = arith.constant 0 : i32
    return %arg0, %c0_i32 : i32, i32
  }
}

</mosaic_0001>

<llo_original>
// kernel: tpu_custom_call.1
$region0: #{tpu_custom_call.1}
  #allocation0 [shape = 'u32[]', space=smem, size = 0x4, offset = 0x4, fixed_abs, tag = 'smem constant byte address 0x4 - core index']
  #allocation1 [shape = 'u32[144,128]{1,0:T(1,128)}', space=vmem, size = 0x12000, scoped, tag = 'internal scratch']
  #allocation2 [shape = 's32[1]{0:T(128)S(6)}', space=smem, size = 0x200, scoped, tag = 'scoped memory for tpu_custom_call.1']
  %s0 = inlined_call_operand.<no memory space> [shape: s32[1], index: 0, kind: input, shape index: {}]
  %s1 = inlined_call_operand.hbm [shape: f32[1,256], index: 1, kind: output, shape index: {}]
  %s2 = sld [smem:[#allocation0]]
  $region14: #{tpu_custom_call.1} parent=0
    _
  %s4 = ssub.s32 1, %s2
  %s5 = scalar_select 0, %s4, %s2
  %6 = sst [smem:[#allocation2]] %s0
  $region1: #{tpu_custom_call.1} parent=0
    #allocation3 [shape = 'u8[1024]{0}', space=vmem, size = 0x400, scoped, tag = 'output window, operand 0, single buffered']
    #allocation4 [shape = 's32[1]{0}', space=sflag, size = 0x4, scoped, tag = 'scoped memory for tpu_custom_call.1']
    %7 = vsyncpa [#allocation4], 0
    // Predicated region
    $region2: #{tpu_custom_call.1} parent=1 // pred_check
      _
    $region3: #{tpu_custom_call.1} parent=1 // pred_check_branch
      %9 = sbr.rel (0) target = $region5
    $region4: #{tpu_custom_call.1} parent=1 // pred_region
      _
    $region5: #{tpu_custom_call.1} parent=1 // pred_fallthru
      _
    %s10 = sld [smem:[#allocation2]]
    %s11 = sxor.u32 %s10, 2654435769
    %s12 = sshra.s32 %s11, 16
    %s13 = sand.u32 %s12, 65535
    %s14 = sxor.u32 %s11, %s13
    %s15 = smul.u32 %s14, 2246822507
    %s16 = sshra.s32 %s15, 13
    %s17 = sand.u32 %s16, 524287
    %s18 = sxor.u32 %s15, %s17
    %s19 = smul.u32 %s18, 3266489909
    %s20 = sshra.s32 %s19, 16
    %s21 = sand.u32 %s20, 65535
    %s22 = sxor.u32 %s19, %s21
    %s23 = sxor.u32 %s10, 2135587861
    %s24 = sshra.s32 %s23, 16
    %s25 = sand.u32 %s24, 65535
    %s26 = sxor.u32 %s23, %s25
    %s27 = smul.u32 %s26, 2246822507
    %s28 = sshra.s32 %s27, 13
    %s29 = sand.u32 %s28, 524287
    %s30 = sxor.u32 %s27, %s29
    %s31 = smul.u32 %s30, 3266489909
    %s32 = sshra.s32 %s31, 16
    %s33 = sand.u32 %s32, 65535
    %s34 = sxor.u32 %s31, %s33
    %v35 = vlaneseq
    %v36 = vshrl.u32 %v35, 7
    %v37 = vstv 0
    %v38 = vadd.s32 %v36, %v37
    %v39 = vlaneseq
    %v40 = vand.u32 %v39, 127
    %v41 = vmul.u32 %v38, 128
    %v42 = vadd.s32 %v41, %v40
    %v43 = vstv %s22
    %v44 = vxor.u32 %v42, %v43
    %v45 = vshra.s32 %v44, 16
    %v46 = vand.u32 %v45, 65535
    %v47 = vxor.u32 %v44, %v46
    %v48 = vmul.u32 %v47, 2246822507
    %v49 = vshra.s32 %v48, 13
    %v50 = vand.u32 %v49, 524287
    %v51 = vxor.u32 %v48, %v50
    %v52 = vmul.u32 %v51, 3266489909
    %v53 = vshra.s32 %v52, 16
    %v54 = vand.u32 %v53, 65535
    %v55 = vxor.u32 %v52, %v54
    %v56 = vshra.s32 %v55, 8
    %v57 = vand.u32 %v56, 16777215
    %v58 = vcvt.s32.f32 %v57
    %v59 = vmul.f32 %v58, 5.9604645e-08
    %v60 = vstv %s34
    %v61 = vxor.u32 %v42, %v60
    %v62 = vshra.s32 %v61, 16
    %v63 = vand.u32 %v62, 65535
    %v64 = vxor.u32 %v61, %v63
    %v65 = vmul.u32 %v64, 2246822507
    %v66 = vshra.s32 %v65, 13
    %v67 = vand.u32 %v66, 524287
    %v68 = vxor.u32 %v65, %v67
    %v69 = vmul.u32 %v68, 3266489909
    %v70 = vshra.s32 %v69, 16
    %v71 = vand.u32 %v70, 65535
    %v72 = vxor.u32 %v69, %v71
    %v73 = vshra.s32 %v72, 8
    %v74 = vand.u32 %v73, 16777215
    %v75 = vcvt.s32.f32 %v74
    %v76 = vmul.f32 %v75, 5.9604645e-08
    %v77 = vsub.f32 1.0, %v59
    %v78 = vlog2.pop %v77
    %v79 = vmul.f32 %v78, 0.6931472
    %v80 = vmul.f32 %v79, -2.0
    %v81 = vrsqrt.pop %v80
    %v82 = vmul.f32 %v80, %v81
    %vm83 = vcmp.eq.f32.partialorder %v80, inf
    %v84 = vsel %vm83, %v80, %v82
    %vm85 = vcmp.eq.f32.partialorder %v80, 0.0
    %v86 = vand.u32 %v80, 2147483648
    %v87 = vsel %vm85, %v86, %v84
    %v88 = vmul.f32 %v76, 6.2831855
    %v89 = vand.u32 2147483647, %v88
    %vm90 = vcmp.le.f32.partialorder %v89, 0.7853982
    %vm91 = vcmp.lt.s32.totalorder %v88, 0
    %v92 = vand.u32 %v88, 2139095040
    %v93 = vshrl.u32 %v92, 23
    %v94 = vsub.s32 %v93, 127
    %v95 = vand.u32 2147483647, %v88
    %v96 = vand.u32 %v95, 8388607
    %v97 = vor.u32 %v96, 8388608
    %v98 = vsub.s32 0, %v97
    %v99 = vadd.s32 %v94, 1
    %vm100 = vcmp.gt.s32.totalorder %v99, 0
    %v101 = vsel %vm100, %v99, 0
    %v102 = vshrl.u32 %v101, 5
    %v103 = vand.u32 %v101, 31
    %v104 = vsub.s32 32, %v103
    %v105 = vshrl.u32 683565275, %v104
    %v106 = vshll.u32 683565275, %v103
    %v107 = vshrl.u32 2475754826, %v104
    %v108 = vor.u32 %v106, %v107
    %v109 = vshll.u32 2475754826, %v103
    %v110 = vshrl.u32 2131351028, %v104
    %v111 = vor.u32 %v109, %v110
    %v112 = vshll.u32 2131351028, %v103
    %v113 = vshrl.u32 2102212464, %v104
    %v114 = vor.u32 %v112, %v113
    %v115 = vshll.u32 2102212464, %v103
    %v116 = vshrl.u32 920167782, %v104
    %v117 = vor.u32 %v115, %v116
    %v118 = vshll.u32 920167782, %v103
    %v119 = vshrl.u32 1326507024, %v104
    %v120 = vor.u32 %v118, %v119
    %vm121 = vcmp.lt.s32.totalorder %v102, 1
    %vm122 = vcmp.lt.s32.totalorder %v102, 2
    %vm123 = vcmp.lt.s32.totalorder %v102, 3
    %vm124 = vcmp.lt.s32.totalorder %v102, 4
    %v125 = vsel %vm121, %v105, %v108
    %v126 = vsel %vm124, %v114, 2102212464
    %v127 = vsel %vm123, %v111, %v126
    %v128 = vsel %vm122, %v125, %v127
    %v129 = vsel %vm121, %v108, %v111
    %v130 = vsel %vm124, %v117, 920167782
    %v131 = vsel %vm123, %v114, %v130
    %v132 = vsel %vm122, %v129, %v131
    %v133 = vsel %vm121, %v111, %v114
    %v134 = vsel %vm124, %v120, 1326507024
    %v135 = vsel %vm123, %v117, %v134
    %v136 = vsel %vm122, %v133, %v135
    %v137 = vshll.u32 %v97, 8
    %v138 = vmul.u32.u64.compose %v137, %v136
    %v139 = vextract.low.u32 %v138
    %v140 = vextract.high.u32 %v138
    %v141 = vmul.u32.u64.compose %v137, %v132
    %v142 = vextract.low.u32 %v141
    %v143 = vextract.high.u32 %v141
    %v144 = vmul.u32 %v137, %v128
    %v145 = vadd.s32 %v140, %v142
    %vm146 = vc.u32 %v140, %v142
    %v147 = vadd.s32 %v143, 1
    %v148 = vsel %vm146, %v147, %v143
    %v149 = vadd.s32 %v144, %v148
    %v150 = vadd.s32 %v149, 536870912
    %v151 = vshrl.u32 %v150, 30
    %v152 = vshll.u32 %v151, 30
    %v153 = vsub.s32 %v149, %v152
    %vm154 = vcmp.lt.s32.totalorder %v153, 0
    %v155 = vsub.s32 0, %v153
    %v156 = vsel %vm154, %v155, %v153
    %v157 = vclz %v156
    %v158 = vsub.s32 %v157, 2
    %vm159 = vcmp.gt.s32.totalorder 0, %v158
    %v160 = vsel %vm159, 0, %v158
    %v161 = vsub.s32 32, %v160
    %v162 = vshll.u32 %v153, %v160
    %v163 = vshrl.u32 %v145, %v161
    %v164 = vor.u32 %v162, %v163
    %v165 = vsub.s32 4294967266, %v160
    %v166 = vadd.s32 %v165, 127
    %v167 = vshll.u32 %v166, 23
    %v168 = vor.u32 4788187, %v167
    %v169 = vand.u32 2147483647, %v168
    %v171 = vcvt.s32.f32 %v164
    %v172 = vmul.f32 %v171, %v169
    %v173 = vxor.u32 %v172, 2147483648
    %v174 = vsel %vm91, %v173, %v172
    %v175 = vsub.s32 4, %v151
    %v176 = vsel %vm91, %v175, %v151
    %v177 = vsel %vm90, %v88, %v174
    %v178 = vsel %vm90, 0, %v176
    %v179 = vcosq.f32.pop %v177
    %v180 = vsinq.f32.pop %v177
    %vm181 = vweird.f32 %v88
    %v182 = vand.u32 %v178, 3
    %vm183 = vcmp.lt.s32.totalorder %v182, 2
    %vm184 = vcmp.eq.s32.totalorder %v182, 0
    %v185 = vxor.u32 %v180, 2147483648
    %v186 = vsel %vm184, %v179, %v185
    %vm187 = vcmp.eq.s32.totalorder %v182, 2
    %v188 = vxor.u32 %v179, 2147483648
    %v189 = vsel %vm187, %v188, %v180
    %v190 = vsel %vm183, %v186, %v189
    %v191 = vsel %vm181, nan, %v190
    %v192 = vmul.f32 %v87, %v191
    %v193 = vlaneseq
    %vm194 = vcmp.ge.s32.totalorder %v193, 0
    %vm195 = vcmp.lt.s32.totalorder %v193, 128
    %vm196 = vmand %vm194, %vm195
    %197 = vst.msk [vmem:[#allocation3] sm:$0x1] %vm196, %v192
    %v198 = vand.u32 2147483647, %v88
    %vm199 = vcmp.le.f32.partialorder %v198, 0.7853982
    %vm200 = vcmp.lt.s32.totalorder %v88, 0
    %v201 = vand.u32 %v88, 2139095040
    %v202 = vshrl.u32 %v201, 23
    %v203 = vsub.s32 %v202, 127
    %v204 = vand.u32 2147483647, %v88
    %v205 = vand.u32 %v204, 8388607
    %v206 = vor.u32 %v205, 8388608
    %v207 = vsub.s32 0, %v206
    %v208 = vadd.s32 %v203, 1
    %vm209 = vcmp.gt.s32.totalorder %v208, 0
    %v210 = vsel %vm209, %v208, 0
    %v211 = vshrl.u32 %v210, 5
    %v212 = vand.u32 %v210, 31
    %v213 = vsub.s32 32, %v212
    %v214 = vshrl.u32 683565275, %v213
    %v215 = vshll.u32 683565275, %v212
    %v216 = vshrl.u32 2475754826, %v213
    %v217 = vor.u32 %v215, %v216
    %v218 = vshll.u32 2475754826, %v212
    %v219 = vshrl.u32 2131351028, %v213
    %v220 = vor.u32 %v218, %v219
    %v221 = vshll.u32 2131351028, %v212
    %v222 = vshrl.u32 2102212464, %v213
    %v223 = vor.u32 %v221, %v222
    %v224 = vshll.u32 2102212464, %v212
    %v225 = vshrl.u32 920167782, %v213
    %v226 = vor.u32 %v224, %v225
    %v227 = vshll.u32 920167782, %v212
    %v228 = vshrl.u32 1326507024, %v213
    %v229 = vor.u32 %v227, %v228
    %vm230 = vcmp.lt.s32.totalorder %v211, 1
    %vm231 = vcmp.lt.s32.totalorder %v211, 2
    %vm232 = vcmp.lt.s32.totalorder %v211, 3
    %vm233 = vcmp.lt.s32.totalorder %v211, 4
    %v234 = vsel %vm230, %v214, %v217
    %v235 = vsel %vm233, %v223, 2102212464
    %v236 = vsel %vm232, %v220, %v235
    %v237 = vsel %vm231, %v234, %v236
    %v238 = vsel %vm230, %v217, %v220
    %v239 = vsel %vm233, %v226, 920167782
    %v240 = vsel %vm232, %v223, %v239
    %v241 = vsel %vm231, %v238, %v240
    %v242 = vsel %vm230, %v220, %v223
    %v243 = vsel %vm233, %v229, 1326507024
    %v244 = vsel %vm232, %v226, %v243
    %v245 = vsel %vm231, %v242, %v244
    %v246 = vshll.u32 %v206, 8
    %v247 = vmul.u32.u64.compose %v246, %v245
    %v248 = vextract.low.u32 %v247
    %v249 = vextract.high.u32 %v247
    %v250 = vmul.u32.u64.compose %v246, %v241
    %v251 = vextract.low.u32 %v250
    %v252 = vextract.high.u32 %v250
    %v253 = vmul.u32 %v246, %v237
    %v254 = vadd.s32 %v249, %v251
    %vm255 = vc.u32 %v249, %v251
    %v256 = vadd.s32 %v252, 1
    %v257 = vsel %vm255, %v256, %v252
    %v258 = vadd.s32 %v253, %v257
    %v259 = vadd.s32 %v258, 536870912
    %v260 = vshrl.u32 %v259, 30
    %v261 = vshll.u32 %v260, 30
    %v262 = vsub.s32 %v258, %v261
    %vm263 = vcmp.lt.s32.totalorder %v262, 0
    %v264 = vsub.s32 0, %v262
    %v265 = vsel %vm263, %v264, %v262
    %v266 = vclz %v265
    %v267 = vsub.s32 %v266, 2
    %vm268 = vcmp.gt.s32.totalorder 0, %v267
    %v269 = vsel %vm268, 0, %v267
    %v270 = vsub.s32 32, %v269
    %v271 = vshll.u32 %v262, %v269
    %v272 = vshrl.u32 %v254, %v270
    %v273 = vor.u32 %v271, %v272
    %v274 = vsub.s32 4294967266, %v269
    %v275 = vadd.s32 %v274, 127
    %v276 = vshll.u32 %v275, 23
    %v277 = vor.u32 4788187, %v276
    %v278 = vand.u32 2147483647, %v277
    %v280 = vcvt.s32.f32 %v273
    %v281 = vmul.f32 %v280, %v278
    %v282 = vxor.u32 %v281, 2147483648
    %v283 = vsel %vm200, %v282, %v281
    %v284 = vsub.s32 4, %v260
    %v285 = vsel %vm200, %v284, %v260
    %v286 = vsel %vm199, %v88, %v283
    %v287 = vsel %vm199, 0, %v285
    %v288 = vcosq.f32.pop %v286
    %v289 = vsinq.f32.pop %v286
    %vm290 = vweird.f32 %v88
    %v291 = vadd.s32 %v287, 3
    %v292 = vand.u32 %v291, 3
    %vm293 = vcmp.lt.s32.totalorder %v292, 2
    %vm294 = vcmp.eq.s32.totalorder %v292, 0
    %v295 = vxor.u32 %v289, 2147483648
    %v296 = vsel %vm294, %v288, %v295
    %vm297 = vcmp.eq.s32.totalorder %v292, 2
    %v298 = vxor.u32 %v288, 2147483648
    %v299 = vsel %vm297, %v298, %v289
    %v300 = vsel %vm293, %v296, %v299
    %v301 = vsel %vm290, nan, %v300
    %v302 = vmul.f32 %v87, %v301
    %303 = vst.msk [vmem:[#allocation3 + $0x1] sm:$0x1] %vm196, %v302
    // Predicated region
    $region6: #{tpu_custom_call.1} parent=1 // pred_check
      _
    $region7: #{tpu_custom_call.1} parent=1 // pred_check_branch
      %305 = sbr.rel (0) target = $region9
    $region8: #{tpu_custom_call.1} parent=1 // pred_region
      %s307 = ssub.s32 32, 32
      %308 = vsyncadd [#allocation4], %s307
      %s310 = sshll.u32 [#allocation3], 4
      %s311 = int_to_ptr.vmem [resolvable:$true] %s310
      %313 = dma.vmem_to_hbm [thread:$0]  %s311, 32, %s1, [#allocation4]
    $region9: #{tpu_custom_call.1} parent=1 // pred_fallthru
      _
    // Predicated region
    $region10: #{tpu_custom_call.1} parent=1 // pred_check
      _
    $region11: #{tpu_custom_call.1} parent=1 // pred_check_branch
      %315 = sbr.rel (0) target = $region13
    $region12: #{tpu_custom_call.1} parent=1 // pred_region
      %316 = dma.done [#allocation4], 32
    $region13: #{tpu_custom_call.1} parent=1 // pred_fallthru
      _
    %317 = vsyncpa [#allocation4], 1

</llo_original>
